<compile_context>
chip_gen: v7x
topology: tpu7x:2x2x1
jax: 0.10.0
libtpu: 0.0.40
codegen_flags: <defaults>
</compile_context>

<pallas_src>
import functools
import math

import jax
import jax.numpy as jnp
from jax.experimental import pallas as pl
from jax.experimental.pallas import tpu as pltpu

_LANE = 128   # vreg lane width
_SUB = 8      # vreg sublane depth


def _flow_loss_kernel(gen_ref, gt_ref, out_ref, *, rows, bm, needs_mask):
    # gen_ref / gt_ref: (bm, 128) input tiles.  out_ref: this step's own
    # (8, 128) block of per-(sublane, lane) partial sums.
    g = gen_ref[...].astype(jnp.float32)
    t = gt_ref[...].astype(jnp.float32)
    d = jnp.abs(g - t)

    if needs_mask:  # static: only traced when the last row-tile is partial
        i = pl.program_id(0)
        row_ids = i * bm + jax.lax.broadcasted_iota(jnp.int32, (bm, _LANE), 0)
        d = jnp.where(row_ids < rows, d, 0.0)

    # (bm,128)->(bm//8,8,128) splits exactly at native (8,128) tiles (no
    # relayout); the axis-0 sum is pure VPU vreg accumulation, and the (8,128)
    # result is a full, unmasked store.
    out_ref[...] = jnp.sum(d.reshape(bm // _SUB, _SUB, _LANE), axis=0)


def flow_loss(gen_flows, gt_flows, *, block_rows=8192):
    """Pallas implementation of Flow_Loss.forward -> scalar f32."""
    assert gen_flows.shape == gt_flows.shape, (gen_flows.shape, gt_flows.shape)
    total = math.prod(gen_flows.shape)
    assert total > 0

    # NOTE: assumes contiguous default-layout inputs so reshape(-1) is a free
    # bitcast; fix layouts at the producer rather than here.
    gen_flat = gen_flows.reshape(-1)
    gt_flat = gt_flows.reshape(-1)

    # Rare fallback: total not a multiple of 128.  Pad by <128 zeros so a
    # lane-dense view exists (|0-0| = 0, so the sum is unchanged).  This is the
    # only path that materializes a full copy; common flow shapes avoid it.
    if total % _LANE != 0:
        pad = _LANE - (total % _LANE)
        gen_flat = jnp.pad(gen_flat, (0, pad))
        gt_flat = jnp.pad(gt_flat, (0, pad))

    rows = gen_flat.shape[0] // _LANE
    gen2 = gen_flat.reshape(rows, _LANE)
    gt2 = gt_flat.reshape(rows, _LANE)

    # Tiny-input fallback: need at least 8 rows so the block sublane dim can be
    # a multiple of 8 without exceeding the array (copy is < 4 KiB here).
    if rows < _SUB:
        gen2 = jnp.pad(gen2, ((0, _SUB - rows), (0, 0)))
        gt2 = jnp.pad(gt2, ((0, _SUB - rows), (0, 0)))
        rows = _SUB

    # Row-tile: multiple of 8, never larger than the array.
    bm = min(block_rows, rows)
    bm = max(_SUB, (bm // _SUB) * _SUB)
    num_blocks = pl.cdiv(rows, bm)
    needs_mask = (rows % bm) != 0  # static: only the ragged last tile needs it

    kernel = functools.partial(
        _flow_loss_kernel, rows=rows, bm=bm, needs_mask=needs_mask
    )

    in_bytes = rows * _LANE * (gen2.dtype.itemsize + gt2.dtype.itemsize)
    out_bytes = num_blocks * _SUB * _LANE * 4
    cost = pl.CostEstimate(
        flops=3 * rows * _LANE,           # sub + abs + add-reduce per element
        transcendentals=0,
        bytes_accessed=in_bytes + out_bytes,
    )

    partials = pl.pallas_call(
        kernel,
        out_shape=jax.ShapeDtypeStruct((num_blocks * _SUB, _LANE), jnp.float32),
        grid=(num_blocks,),
        in_specs=[
            pl.BlockSpec((bm, _LANE), lambda i: (i, 0)),
            pl.BlockSpec((bm, _LANE), lambda i: (i, 0)),
        ],
        out_specs=pl.BlockSpec((_SUB, _LANE), lambda i: (i, 0)),
        compiler_params=pltpu.CompilerParams(
            # Each step owns a disjoint output block -> safe to parallelize;
            # on v7x, if a trace shows only one TC active, switch this axis to
            # pltpu.CORE_PARALLEL for the 2x core split.
            dimension_semantics=("parallel",),
            vmem_limit_bytes=40 << 20,
        ),
        cost_estimate=cost,
    )(gen2, gt2)

    # Padded / masked positions contribute exactly 0; divide by the true count.
    return jnp.sum(partials) / jnp.float32(total)


def flow_loss_ref(gen_flows, gt_flows):
    """Pure-JAX reference mirroring the PyTorch module exactly."""
    return jnp.mean(
        jnp.abs(gen_flows.astype(jnp.float32) - gt_flows.astype(jnp.float32))
    )


if __name__ == "__main__":
    key = jax.random.PRNGKey(0)
    k1, k2, k3, k4, k5, k6 = jax.random.split(key, 6)

    # Primary: flow-map-like (N, C, H, W), lane-aligned, single-block path.
    gen = jax.random.normal(k1, (2, 4, 16, 16), dtype=jnp.float32)
    gt = jax.random.normal(k2, (2, 4, 16, 16), dtype=jnp.float32)
    out = jax.block_until_ready(flow_loss(gen, gt))
    ref = flow_loss_ref(gen, gt)
    assert jnp.allclose(out, ref, rtol=1e-5, atol=1e-5), (float(out), float(ref))

    # Multi-block "parallel" grid with a ragged last row-tile (in-kernel mask).
    gen2 = jax.random.normal(k3, (3, 4, 17, 32), dtype=jnp.float32)
    gt2 = jax.random.normal(k4, (3, 4, 17, 32), dtype=jnp.float32)
    out2 = jax.block_until_ready(flow_loss(gen2, gt2, block_rows=16))
    ref2 = flow_loss_ref(gen2, gt2)
    assert jnp.allclose(out2, ref2, rtol=1e-5, atol=1e-5), (float(out2), float(ref2))

    # total % 128 != 0 and rows < 8: exercises the tiny pad fallback paths.
    gen3 = jax.random.normal(k5, (2, 3, 5, 7), dtype=jnp.float32)
    gt3 = jax.random.normal(k6, (2, 3, 5, 7), dtype=jnp.float32)
    out3 = jax.block_until_ready(flow_loss(gen3, gt3))
    ref3 = flow_loss_ref(gen3, gt3)
    assert jnp.allclose(out3, ref3, rtol=1e-5, atol=1e-5), (float(out3), float(ref3))

    # bf16 inputs (half the HBM traffic); kernel upcasts per-tile to f32.
    genb = gen.astype(jnp.bfloat16)
    gtb = gt.astype(jnp.bfloat16)
    outb = jax.block_until_ready(flow_loss(genb, gtb))
    refb = flow_loss_ref(genb, gtb)
    assert jnp.allclose(outb, refb, rtol=1e-5, atol=1e-5), (float(outb), float(refb))

    print("KERNEL_OK")
</pallas_src>

<mosaic_0001>
module attributes {stable_mosaic.version = 11 : i64} {
  func.func @_flow_loss_kernel(%arg0: i32, %arg1: memref<16x128xf32, #tpu.memory_space<vmem>>, %arg2: memref<16x128xf32, #tpu.memory_space<vmem>>, %arg3: memref<8x128xf32, #tpu.memory_space<vmem>>) attributes {dimension_semantics = [#tpu.dimension_semantics<parallel>], iteration_bounds = array<i64: 1>, scalar_prefetch = 0 : i64, scratch_operands = 0 : i64, tpu.core_type = #tpu.core_type<tc>, window_params = [{transform_indices = @transform_0, window_bounds = array<i64: 16, 128>}, {transform_indices = @transform_1, window_bounds = array<i64: 16, 128>}, {transform_indices = @transform_2, window_bounds = array<i64: 8, 128>}]} {
    %c0 = arith.constant 0 : index
    %c0_0 = arith.constant 0 : index
    %0 = vector.load %arg1[%c0, %c0_0] : memref<16x128xf32, #tpu.memory_space<vmem>>, vector<16x128xf32>
    %c0_1 = arith.constant 0 : index
    %c0_2 = arith.constant 0 : index
    %1 = vector.load %arg2[%c0_1, %c0_2] : memref<16x128xf32, #tpu.memory_space<vmem>>, vector<16x128xf32>
    %2 = arith.subf %0, %1 : vector<16x128xf32>
    %3 = math.absf %2 : vector<16x128xf32>
    %4 = vector.shape_cast %3 : vector<16x128xf32> to vector<2x8x128xf32>
    %cst = arith.constant dense<0.000000e+00> : vector<8x128xf32>
    %5 = vector.multi_reduction <add>, %4, %cst [0] : vector<2x8x128xf32> to vector<8x128xf32>
    %c0_3 = arith.constant 0 : index
    %c0_4 = arith.constant 0 : index
    %6 = vector.load %arg3[%c0_3, %c0_4] : memref<8x128xf32, #tpu.memory_space<vmem>>, vector<8x128xf32>
    tpu.vector_store %arg3[%c0_3, %c0_4], %5 {strides = array<i32>} : memref<8x128xf32, #tpu.memory_space<vmem>>, vector<8x128xf32>,
    return
  }
  func.func @transform_0(%arg0: i32) -> (i32, i32) {
    %c0_i32 = arith.constant 0 : i32
    %c0_i32_0 = arith.constant 0 : i32
    return %arg0, %c0_i32 : i32, i32
  }
  func.func @transform_1(%arg0: i32) -> (i32, i32) {
    %c0_i32 = arith.constant 0 : i32
    %c0_i32_0 = arith.constant 0 : i32
    return %arg0, %c0_i32 : i32, i32
  }
  func.func @transform_2(%arg0: i32) -> (i32, i32) {
    %c0_i32 = arith.constant 0 : i32
    %c0_i32_0 = arith.constant 0 : i32
    return %arg0, %c0_i32 : i32, i32
  }
}

</mosaic_0001>

<llo_original>
// kernel: tpu_custom_call.1
$region0: #{tpu_custom_call.1}
  #allocation0 [shape = 'u32[]', space=smem, size = 0x4, offset = 0x4, fixed_abs, tag = 'smem constant byte address 0x4 - core index']
  #allocation1 [shape = 'u32[144,128]{1,0:T(1,128)}', space=vmem, size = 0x12000, scoped, tag = 'internal scratch']
  %s0 = inlined_call_operand.hbm [shape: f32[16,128], index: 0, kind: input, shape index: {}]
  %s1 = inlined_call_operand.hbm [shape: f32[16,128], index: 1, kind: input, shape index: {}]
  %s2 = inlined_call_operand.hbm [shape: f32[8,128], index: 2, kind: output, shape index: {}]
  %s3 = sld [smem:[#allocation0]]
  $region26: #{tpu_custom_call.1} parent=0
    _
  %s5 = ssub.s32 1, %s3
  %s6 = scalar_select 0, %s5, %s3
  $region1: #{tpu_custom_call.1} parent=0
    #allocation2 [shape = 'u8[8192]{0}', space=vmem, size = 0x2000, scoped, tag = 'input window, operand 0, single buffered']
    #allocation3 [shape = 's32[1]{0}', space=sflag, size = 0x4, scoped, tag = 'scoped memory for tpu_custom_call.1']
    #allocation4 [shape = 's32[1]{0}', space=sflag, size = 0x4, scoped, tag = 'scoped memory for tpu_custom_call.1']
    #allocation5 [shape = 'u8[8192]{0}', space=vmem, size = 0x2000, scoped, tag = 'input window, operand 1, single buffered']
    #allocation6 [shape = 's32[1]{0}', space=sflag, size = 0x4, scoped, tag = 'scoped memory for tpu_custom_call.1']
    #allocation7 [shape = 'u8[4096]{0}', space=vmem, size = 0x1000, scoped, tag = 'output window, operand 0, single buffered']
    %7 = vsyncpa [#allocation3], 0
    %8 = vsyncpa [#allocation6], 0
    %9 = vsyncpa [#allocation4], 0
    // Predicated region
    $region2: #{tpu_custom_call.1} parent=1 // pred_check
      _
    $region3: #{tpu_custom_call.1} parent=1 // pred_check_branch
      %11 = sbr.rel (0) target = $region5
    $region4: #{tpu_custom_call.1} parent=1 // pred_region
      %s13 = ssub.s32 256, 256
      %14 = vsyncadd [#allocation3], %s13
      %s15 = sshll.u32 [#allocation2], 4
      %s16 = int_to_ptr.vmem [resolvable:$true] %s15
      %21 = dma.hbm_to_vmem [thread:$0]  %s0, 256, %s16, [#allocation3], 128, 128, 8
    $region5: #{tpu_custom_call.1} parent=1 // pred_fallthru
      _
    // Predicated region
    $region6: #{tpu_custom_call.1} parent=1 // pred_check
      _
    $region7: #{tpu_custom_call.1} parent=1 // pred_check_branch
      %23 = sbr.rel (0) target = $region9
    $region8: #{tpu_custom_call.1} parent=1 // pred_region
      %s25 = ssub.s32 256, 256
      %26 = vsyncadd [#allocation6], %s25
      %s27 = sshll.u32 [#allocation5], 4
      %s28 = int_to_ptr.vmem [resolvable:$true] %s27
      %33 = dma.hbm_to_vmem [thread:$0]  %s1, 256, %s28, [#allocation6], 128, 128, 8
    $region9: #{tpu_custom_call.1} parent=1 // pred_fallthru
      _
    // Predicated region
    $region10: #{tpu_custom_call.1} parent=1 // pred_check
      _
    $region11: #{tpu_custom_call.1} parent=1 // pred_check_branch
      %35 = sbr.rel (0) target = $region13
    $region12: #{tpu_custom_call.1} parent=1 // pred_region
      %36 = dma.done [#allocation3], 256
    $region13: #{tpu_custom_call.1} parent=1 // pred_fallthru
      _
    // Predicated region
    $region14: #{tpu_custom_call.1} parent=1 // pred_check
      _
    $region15: #{tpu_custom_call.1} parent=1 // pred_check_branch
      %38 = sbr.rel (0) target = $region17
    $region16: #{tpu_custom_call.1} parent=1 // pred_region
      %39 = dma.done [#allocation6], 256
    $region17: #{tpu_custom_call.1} parent=1 // pred_fallthru
      _
    %v40 = vld [vmem:[#allocation2] sm:$0xff]
    %v41 = vld [vmem:[#allocation2 + $0x8] sm:$0xff]
    %v42 = vld [vmem:[#allocation5] sm:$0xff]
    %v43 = vld [vmem:[#allocation5 + $0x8] sm:$0xff]
    %v44 = vsub.f32 %v40, %v42
    %v45 = vsub.f32 %v41, %v43
    %v46 = vand.u32 2147483647, %v44
    %v47 = vand.u32 2147483647, %v45
    %v48 = vadd.f32 %v46, %v47
    %49 = vst [vmem:[#allocation7] sm:$0xff] %v48
    // Predicated region
    $region18: #{tpu_custom_call.1} parent=1 // pred_check
      _
    $region19: #{tpu_custom_call.1} parent=1 // pred_check_branch
      %51 = sbr.rel (0) target = $region21
    $region20: #{tpu_custom_call.1} parent=1 // pred_region
      %s53 = ssub.s32 128, 128
      %54 = vsyncadd [#allocation4], %s53
      %s56 = sshll.u32 [#allocation7], 4
      %s57 = int_to_ptr.vmem [resolvable:$true] %s56
      %59 = dma.vmem_to_hbm [thread:$0]  %s57, 128, %s2, [#allocation4]
    $region21: #{tpu_custom_call.1} parent=1 // pred_fallthru
      _
    // Predicated region
    $region22: #{tpu_custom_call.1} parent=1 // pred_check
      _
    $region23: #{tpu_custom_call.1} parent=1 // pred_check_branch
      %61 = sbr.rel (0) target = $region25
    $region24: #{tpu_custom_call.1} parent=1 // pred_region
      %62 = dma.done [#allocation4], 128
    $region25: #{tpu_custom_call.1} parent=1 // pred_fallthru
      _
    %63 = vsyncpa [#allocation3], 1
    %64 = vsyncpa [#allocation6], 1
    %65 = vsyncpa [#allocation4], 1

</llo_original>
